<compile_context>
chip_gen: v5e
topology: v5e:2x2
jax: 0.10.0
libtpu: 0.0.40
codegen_flags: <defaults>
</compile_context>

<pallas_src>
import functools
import math

import jax
import jax.numpy as jnp
from jax.experimental import pallas as pl
from jax.experimental.pallas import tpu as pltpu

LANE = 128  # TPU lane width; hidden dims are zero-padded to a multiple of this.


def _round_up(n, m):
    return ((n + m - 1) // m) * m


def _pad2d(x, rows, cols):
    return jnp.pad(x, ((0, rows - x.shape[0]), (0, cols - x.shape[1])))


# --------------------------------------------------------------------------
# Pallas kernel: one grid step scores TB towers (the pos block or the neg
# block).  Only the last query token's attention row is computed because the
# reward head consumes last_hidden_state[:, -1, :] only.
# --------------------------------------------------------------------------
def tower_block_kernel(x_ref, m_ref, w_ref, head_ref, out_ref,
                       *, scale, hp, fh, tb, t):
    # weight slab columns: [ Wk|Wv (2HP) | Wq (HP) | Wo (HP) | W1 (FH) ]
    wkv = w_ref[:, : 2 * hp]                 # (HP, 2HP) bf16
    wq = w_ref[:, 2 * hp: 3 * hp]            # (HP, HP)  bf16
    wo = w_ref[:, 3 * hp: 4 * hp]            # (HP, HP)  bf16
    w1 = w_ref[:, 4 * hp: 4 * hp + fh]       # (HP, FH)  bf16

    x = x_ref[...]                           # (TB, T, HP) bf16 embedded tokens
    m = m_ref[...]                           # (TB, 1, T)  f32 key mask, 1 = keep

    # --- fused K/V projection over all TB*T token rows (one MXU matmul) ---
    x2d = x.reshape(tb * t, hp)
    kv = jnp.dot(x2d, wkv, preferred_element_type=jnp.float32)       # (TB*T, 2HP)
    kv = kv.reshape(tb, t, 2 * hp)
    k = kv[:, :, :hp].astype(jnp.bfloat16)                           # (TB, T, HP)
    v = kv[:, :, hp:].astype(jnp.bfloat16)                           # (TB, T, HP)

    # --- query for the last token of each tower only ---
    x_last = x[:, t - 1, :]                                          # (TB, HP) bf16
    q = jnp.dot(x_last, wq, preferred_element_type=jnp.float32)      # (TB, HP) f32
    q3 = q.astype(jnp.bfloat16).reshape(tb, 1, hp)                   # (TB, 1, HP)

    # --- scores contract on hidden (no k.T relayout); additive mask bias ---
    s = jnp.einsum("bqh,bkh->bqk", q3, k,
                   preferred_element_type=jnp.float32) * scale       # (TB, 1, T)
    s = s + (m - 1.0) * jnp.float32(1e30)                            # 0 keep / -1e30 drop

    # --- softmax over keys (f32; reciprocal on the EUP slot) ---
    s_max = jnp.max(s, axis=-1, keepdims=True)
    p = jnp.exp(s - s_max)
    denom = jnp.sum(p, axis=-1, keepdims=True)
    attn = (p * pl.reciprocal(denom, approx=True)).astype(jnp.bfloat16)

    # --- context + output projection + residual (last tokens only) ---
    ctx = jnp.einsum("bqk,bkd->bqd", attn, v,
                     preferred_element_type=jnp.float32)             # (TB, 1, HP)
    ctx2d = ctx.reshape(tb, hp)
    h_last = (jnp.dot(ctx2d.astype(jnp.bfloat16), wo,
                      preferred_element_type=jnp.float32)
              + x_last.astype(jnp.float32))                          # (TB, HP)

    # --- ff head: Linear(H, 64) -> SiLU -> Linear(64, 1) (padded to 128) ---
    b1 = head_ref[0:1, :]                                            # (1, FH)
    w2t = head_ref[1:2, :]                                           # (1, FH) = w2^T
    b2 = head_ref[2:3, 0:1]                                          # (1, 1)
    hid = jnp.dot(h_last.astype(jnp.bfloat16), w1,
                  preferred_element_type=jnp.float32) + b1           # (TB, FH)
    hid = hid * jax.nn.sigmoid(hid)                                  # SiLU (f32)
    sc = jnp.sum(hid * w2t, axis=-1, keepdims=True) + b2             # (TB, 1)

    # --- lane-dense writeback: broadcast each score across a 128-lane row ---
    out_ref[0] = jnp.broadcast_to(sc, (tb, LANE))


# --------------------------------------------------------------------------
# Wrapper (glue stays in XLA: gathers, concats, weight padding/packing)
# --------------------------------------------------------------------------
def bind_embeddings(tokens, embed_table, type_emb, summary_length):
    """BindEmbeddings.forward: embed(post part) ++ type token ++ embed(summary part)."""
    b = tokens.shape[0]
    post_emb = jnp.take(embed_table, tokens[:, :-summary_length], axis=0)
    summ_emb = jnp.take(embed_table, tokens[:, -summary_length:], axis=0)
    type_tok = jnp.broadcast_to(type_emb, (b, 1, type_emb.shape[-1]))
    return jnp.concatenate([post_emb, type_tok, summ_emb], axis=1)


def reward_model_forward(params, post, pos, neg, pos_mask, neg_mask,
                         summary_length):
    """forward(post, pos, neg, pos_mask, neg_mask) -> pos_score - neg_score, shape (B,)."""
    b = post.shape[0]
    hidden = params["embed_table"].shape[1]          # logical hidden (32)
    hp = _round_up(hidden, LANE)                     # lane-padded hidden (128)
    fh = _round_up(params["w1"].shape[1], LANE)      # lane-padded ff hidden (128)
    vocab = params["embed_table"].shape[0]

    # ---- pad + cast weights once (wrapper-side layout plumbing; exact) ----
    emb = _pad2d(params["embed_table"], vocab, hp).astype(jnp.bfloat16)
    type_emb = jnp.pad(params["type_emb"],
                       ((0, 0), (0, 0), (0, hp - hidden))).astype(jnp.bfloat16)

    # one bf16 weight slab: [Wk | Wv | Wq | Wo | W1] -> (HP, 4*HP + FH)
    w_slab = jnp.concatenate(
        [_pad2d(params["wk"], hp, hp),
         _pad2d(params["wv"], hp, hp),
         _pad2d(params["wq"], hp, hp),
         _pad2d(params["wo"], hp, hp),
         _pad2d(params["w1"], hp, fh)], axis=1).astype(jnp.bfloat16)

    # tiny f32 "head" slab: row0 = b1, row1 = w2^T, row2[0] = b2
    head = jnp.zeros((8, fh), jnp.float32)
    head = head.at[0, : params["b1"].shape[1]].set(params["b1"][0])
    head = head.at[1, : params["w2"].shape[0]].set(params["w2"][:, 0])
    head = head.at[2, 0].set(params["b2"][0, 0])

    # ---- BindEmbeddings for both towers (bf16 embeddings) ----
    x_pos = bind_embeddings(jnp.concatenate([post, pos], axis=1),
                            emb, type_emb, summary_length)
    x_neg = bind_embeddings(jnp.concatenate([post, neg], axis=1),
                            emb, type_emb, summary_length)
    t = x_pos.shape[1]  # post_len + 1 (type token) + summary_length

    # ---- batch TB=B towers per grid step: step 0 = pos block, step 1 = neg block
    tb = b
    x = jnp.concatenate([x_pos, x_neg], axis=0)                         # (2B, T, HP) bf16
    m = jnp.concatenate([pos_mask, neg_mask],
                        axis=0).astype(jnp.float32).reshape(2 * b, 1, t)

    flops_step = 2 * (tb * t * hp * 2 * hp     # fused K/V projection
                      + tb * hp * hp           # q projection
                      + tb * t * hp            # scores
                      + tb * t * hp            # context
                      + tb * hp * hp           # Wo projection
                      + tb * hp * fh + tb * fh)  # ff head
    cost = pl.CostEstimate(
        flops=2 * flops_step,
        transcendentals=2 * tb * (t + fh + 1),
        bytes_accessed=(x.size * 2 + m.size * 4
                        + 2 * (w_slab.size * 2 + head.size * 4)
                        + 2 * tb * LANE * 4))

    scores = pl.pallas_call(
        functools.partial(tower_block_kernel, scale=1.0 / math.sqrt(hidden),
                          hp=hp, fh=fh, tb=tb, t=t),
        out_shape=jax.ShapeDtypeStruct((2, tb, LANE), jnp.float32),
        grid=(2,),
        in_specs=[
            pl.BlockSpec((tb, t, hp), lambda i: (i, 0, 0)),      # embedded tokens
            pl.BlockSpec((tb, 1, t), lambda i: (i, 0, 0)),       # key mask
            pl.BlockSpec((hp, 4 * hp + fh), lambda i: (0, 0)),   # packed weight slab
            pl.BlockSpec((8, fh), lambda i: (0, 0)),             # b1 / w2^T / b2
        ],
        out_specs=pl.BlockSpec((1, tb, LANE), lambda i: (i, 0, 0)),
        compiler_params=pltpu.CompilerParams(
            dimension_semantics=("parallel",)),
        cost_estimate=cost,
    )(x, m, w_slab, head)

    pos_score = scores[0, :, 0]
    neg_score = scores[1, :, 0]
    return pos_score - neg_score   # shape (B,)


def init_params(key, vocab, hidden):
    ks = jax.random.split(key, 10)
    scale = 0.02
    return {
        "embed_table": scale * jax.random.normal(ks[0], (vocab, hidden), jnp.float32),
        "type_emb":    jax.random.uniform(ks[1], (1, 1, hidden), jnp.float32),
        "wq": scale * jax.random.normal(ks[2], (hidden, hidden), jnp.float32),
        "wk": scale * jax.random.normal(ks[3], (hidden, hidden), jnp.float32),
        "wv": scale * jax.random.normal(ks[4], (hidden, hidden), jnp.float32),
        "wo": scale * jax.random.normal(ks[5], (hidden, hidden), jnp.float32),
        "w1": scale * jax.random.normal(ks[6], (hidden, 64), jnp.float32),
        "b1": jnp.zeros((1, 64), jnp.float32),
        "w2": scale * jax.random.normal(ks[7], (64, 1), jnp.float32),
        "b2": jnp.zeros((1, 1), jnp.float32),
    }


if __name__ == "__main__":
    B = 2            # batch
    POST_LEN = 8     # post token length
    SUM_LEN = 7      # summary_length (small stand-in for max_length_sum=50)
    HIDDEN = 32      # logical hidden size (padded to 128 lanes in the wrapper)
    VOCAB = 64
    T = POST_LEN + SUM_LEN + 1   # +1 for the BindEmbeddings type token

    key = jax.random.PRNGKey(0)
    k_post, k_pos, k_neg = jax.random.split(key, 3)

    post = jax.random.randint(k_post, (B, POST_LEN), 0, VOCAB, jnp.int32)
    pos = jax.random.randint(k_pos, (B, SUM_LEN), 0, VOCAB, jnp.int32)
    neg = jax.random.randint(k_neg, (B, SUM_LEN), 0, VOCAB, jnp.int32)
    # masks cover the embedded sequence (post + type token + summary) = T tokens
    pos_mask = jnp.ones((B, T), jnp.float32)
    neg_mask = jnp.ones((B, T), jnp.float32)

    params = init_params(jax.random.PRNGKey(42), VOCAB, HIDDEN)

    fwd = jax.jit(functools.partial(reward_model_forward,
                                    summary_length=SUM_LEN))
    out = fwd(params, post, pos, neg, pos_mask, neg_mask)
    out = jax.block_until_ready(out)
    assert out.shape == (B,), out.shape
    print("KERNEL_OK")
</pallas_src>

<mosaic_0001>
module attributes {stable_mosaic.version = 11 : i64} {
  func.func @tower_block_kernel(%arg0: i32, %arg1: memref<2x16x128xbf16, #tpu.memory_space<vmem>>, %arg2: memref<2x1x16xf32, #tpu.memory_space<vmem>>, %arg3: memref<128x640xbf16, #tpu.memory_space<vmem>>, %arg4: memref<8x128xf32, #tpu.memory_space<vmem>>, %arg5: memref<1x2x128xf32, #tpu.memory_space<vmem>>) attributes {dimension_semantics = [#tpu.dimension_semantics<parallel>], iteration_bounds = array<i64: 2>, scalar_prefetch = 0 : i64, scratch_operands = 0 : i64, tpu.core_type = #tpu.core_type<tc>, window_params = [{transform_indices = @transform_0, window_bounds = array<i64: 2, 16, 128>}, {transform_indices = @transform_1, window_bounds = array<i64: 2, 1, 16>}, {pipeline_mode = #tpu.pipeline_mode<synchronous>, transform_indices = @transform_2, window_bounds = array<i64: 128, 640>}, {pipeline_mode = #tpu.pipeline_mode<synchronous>, transform_indices = @transform_3, window_bounds = array<i64: 8, 128>}, {transform_indices = @transform_4, window_bounds = array<i64: 1, 2, 128>}]} {
    %c0 = arith.constant 0 : index
    %c0_0 = arith.constant 0 : index
    %0 = vector.load %arg3[%c0, %c0_0] : memref<128x640xbf16, #tpu.memory_space<vmem>>, vector<128x256xbf16>
    %c0_1 = arith.constant 0 : index
    %c256 = arith.constant 256 : index
    %1 = vector.load %arg3[%c0_1, %c256] : memref<128x640xbf16, #tpu.memory_space<vmem>>, vector<128x128xbf16>
    %c0_2 = arith.constant 0 : index
    %c384 = arith.constant 384 : index
    %2 = vector.load %arg3[%c0_2, %c384] : memref<128x640xbf16, #tpu.memory_space<vmem>>, vector<128x128xbf16>
    %c0_3 = arith.constant 0 : index
    %c512 = arith.constant 512 : index
    %3 = vector.load %arg3[%c0_3, %c512] : memref<128x640xbf16, #tpu.memory_space<vmem>>, vector<128x128xbf16>
    %c0_4 = arith.constant 0 : index
    %c0_5 = arith.constant 0 : index
    %c0_6 = arith.constant 0 : index
    %4 = vector.load %arg1[%c0_4, %c0_5, %c0_6] : memref<2x16x128xbf16, #tpu.memory_space<vmem>>, vector<2x16x128xbf16>
    %c0_7 = arith.constant 0 : index
    %c0_8 = arith.constant 0 : index
    %c0_9 = arith.constant 0 : index
    %5 = vector.load %arg2[%c0_7, %c0_8, %c0_9] : memref<2x1x16xf32, #tpu.memory_space<vmem>>, vector<2x1x16xf32>
    %6 = vector.shape_cast %4 : vector<2x16x128xbf16> to vector<32x128xbf16>
    %cst = arith.constant dense<0.000000e+00> : vector<32x256xf32>
    %7 = tpu.matmul %6, %0, %cst {dimension_numbers = #tpu.dot_dimension_numbers<[1], [0], [0], [1], [0, 0, 1, 1], [], []>} : vector<32x128xbf16>, vector<128x256xbf16>, vector<32x256xf32> -> vector<32x256xf32>
    %8 = vector.shape_cast %7 : vector<32x256xf32> to vector<2x16x256xf32>
    %9 = vector.extract_strided_slice %8 {offsets = [0, 0, 0], sizes = [2, 16, 128], strides = [1, 1, 1]} : vector<2x16x256xf32> to vector<2x16x128xf32>
    %10 = arith.truncf %9 : vector<2x16x128xf32> to vector<2x16x128xbf16>
    %11 = vector.extract_strided_slice %8 {offsets = [0, 0, 128], sizes = [2, 16, 128], strides = [1, 1, 1]} : vector<2x16x256xf32> to vector<2x16x128xf32>
    %12 = arith.truncf %11 : vector<2x16x128xf32> to vector<2x16x128xbf16>
    %13 = vector.extract_strided_slice %4 {offsets = [0, 15, 0], sizes = [2, 1, 128], strides = [1, 1, 1]} : vector<2x16x128xbf16> to vector<2x1x128xbf16>
    %14 = vector.shape_cast %13 : vector<2x1x128xbf16> to vector<2x128xbf16>
    %cst_10 = arith.constant dense<0.000000e+00> : vector<2x128xf32>
    %15 = tpu.matmul %14, %1, %cst_10 {dimension_numbers = #tpu.dot_dimension_numbers<[1], [0], [0], [1], [0, 0, 1, 1], [], []>} : vector<2x128xbf16>, vector<128x128xbf16>, vector<2x128xf32> -> vector<2x128xf32>
    %16 = arith.truncf %15 : vector<2x128xf32> to vector<2x128xbf16>
    %17 = vector.shape_cast %16 : vector<2x128xbf16> to vector<2x1x128xbf16>
    "tpu.trace_start"() <{level = 10 : i32, message = "bqh,bkh->bqk"}> : () -> ()
    %cst_11 = arith.constant dense<0.000000e+00> : vector<2x1x16xf32>
    %18 = tpu.matmul %17, %10, %cst_11 {dimension_numbers = #tpu.dot_dimension_numbers<[2], [2], [1], [1], [0, 0, 0, 1, 1, 1], [0], [0]>} : vector<2x1x128xbf16>, vector<2x16x128xbf16>, vector<2x1x16xf32> -> vector<2x1x16xf32>
    "tpu.trace_stop"() : () -> ()
    %cst_12 = arith.constant 0.176776692 : f32
    %19 = vector.broadcast %cst_12 : f32 to vector<2x1x16xf32>
    %20 = arith.mulf %18, %19 : vector<2x1x16xf32>
    %cst_13 = arith.constant 1.000000e+00 : f32
    %21 = vector.broadcast %cst_13 : f32 to vector<2x1x16xf32>
    %22 = arith.subf %5, %21 : vector<2x1x16xf32>
    %cst_14 = arith.constant 1.000000e+30 : f32
    %23 = vector.broadcast %cst_14 : f32 to vector<2x1x16xf32>
    %24 = arith.mulf %22, %23 : vector<2x1x16xf32>
    %25 = arith.addf %20, %24 : vector<2x1x16xf32>
    %cst_15 = arith.constant dense<0xFF800000> : vector<2x1xf32>
    %26 = vector.multi_reduction <maximumf>, %25, %cst_15 [2] : vector<2x1x16xf32> to vector<2x1xf32>
    %27 = vector.shape_cast %26 : vector<2x1xf32> to vector<2x1x1xf32>
    %28 = vector.broadcast %27 : vector<2x1x1xf32> to vector<2x1x16xf32>
    %29 = arith.subf %25, %28 : vector<2x1x16xf32>
    %30 = math.exp %29 : vector<2x1x16xf32>
    %cst_16 = arith.constant dense<0.000000e+00> : vector<2x1xf32>
    %31 = vector.multi_reduction <add>, %30, %cst_16 [2] : vector<2x1x16xf32> to vector<2x1xf32>
    %32 = vector.shape_cast %31 : vector<2x1xf32> to vector<2x1x1xf32>
    %33 = tpu.reciprocal %32 {approx = true} : vector<2x1x1xf32> -> vector<2x1x1xf32>
    %34 = vector.broadcast %33 : vector<2x1x1xf32> to vector<2x1x16xf32>
    %35 = arith.mulf %30, %34 : vector<2x1x16xf32>
    %36 = arith.truncf %35 : vector<2x1x16xf32> to vector<2x1x16xbf16>
    "tpu.trace_start"() <{level = 10 : i32, message = "bqk,bkd->bqd"}> : () -> ()
    %cst_17 = arith.constant dense<0.000000e+00> : vector<2x1x128xf32>
    %37 = tpu.matmul %36, %12, %cst_17 {dimension_numbers = #tpu.dot_dimension_numbers<[2], [1], [1], [2], [0, 0, 0, 1, 1, 2], [0], [0]>} : vector<2x1x16xbf16>, vector<2x16x128xbf16>, vector<2x1x128xf32> -> vector<2x1x128xf32>
    "tpu.trace_stop"() : () -> ()
    %38 = vector.shape_cast %37 : vector<2x1x128xf32> to vector<2x128xf32>
    %39 = arith.truncf %38 : vector<2x128xf32> to vector<2x128xbf16>
    %cst_18 = arith.constant dense<0.000000e+00> : vector<2x128xf32>
    %40 = tpu.matmul %39, %2, %cst_18 {dimension_numbers = #tpu.dot_dimension_numbers<[1], [0], [0], [1], [0, 0, 1, 1], [], []>} : vector<2x128xbf16>, vector<128x128xbf16>, vector<2x128xf32> -> vector<2x128xf32>
    %41 = arith.extf %14 : vector<2x128xbf16> to vector<2x128xf32>
    %42 = arith.addf %40, %41 : vector<2x128xf32>
    %c0_19 = arith.constant 0 : index
    %c0_20 = arith.constant 0 : index
    %43 = vector.load %arg4[%c0_19, %c0_20] : memref<8x128xf32, #tpu.memory_space<vmem>>, vector<1x128xf32>
    %c1 = arith.constant 1 : index
    %c0_21 = arith.constant 0 : index
    %44 = vector.load %arg4[%c1, %c0_21] : memref<8x128xf32, #tpu.memory_space<vmem>>, vector<1x128xf32>
    %c2 = arith.constant 2 : index
    %c0_22 = arith.constant 0 : index
    %45 = vector.load %arg4[%c2, %c0_22] : memref<8x128xf32, #tpu.memory_space<vmem>>, vector<1x1xf32>
    %46 = arith.truncf %42 : vector<2x128xf32> to vector<2x128xbf16>
    %cst_23 = arith.constant dense<0.000000e+00> : vector<2x128xf32>
    %47 = tpu.matmul %46, %3, %cst_23 {dimension_numbers = #tpu.dot_dimension_numbers<[1], [0], [0], [1], [0, 0, 1, 1], [], []>} : vector<2x128xbf16>, vector<128x128xbf16>, vector<2x128xf32> -> vector<2x128xf32>
    %48 = vector.broadcast %43 : vector<1x128xf32> to vector<2x128xf32>
    %49 = arith.addf %47, %48 : vector<2x128xf32>
    %50 = arith.negf %49 : vector<2x128xf32>
    %51 = math.exp %50 : vector<2x128xf32>
    %cst_24 = arith.constant 1.000000e+00 : f32
    %52 = vector.broadcast %cst_24 : f32 to vector<2x128xf32>
    %53 = arith.addf %52, %51 : vector<2x128xf32>
    %54 = arith.divf %52, %53 : vector<2x128xf32>
    %55 = arith.mulf %49, %54 : vector<2x128xf32>
    %56 = vector.broadcast %44 : vector<1x128xf32> to vector<2x128xf32>
    %57 = arith.mulf %55, %56 : vector<2x128xf32>
    %cst_25 = arith.constant dense<0.000000e+00> : vector<2xf32>
    %58 = vector.multi_reduction <add>, %57, %cst_25 [1] : vector<2x128xf32> to vector<2xf32>
    %59 = vector.shape_cast %58 : vector<2xf32> to vector<2x1xf32>
    %60 = vector.broadcast %45 : vector<1x1xf32> to vector<2x1xf32>
    %61 = arith.addf %59, %60 : vector<2x1xf32>
    %62 = vector.shape_cast %61 : vector<2x1xf32> to vector<2x1xf32>
    %63 = vector.broadcast %62 : vector<2x1xf32> to vector<2x128xf32>
    %c0_26 = arith.constant 0 : index
    %c0_27 = arith.constant 0 : index
    %c0_28 = arith.constant 0 : index
    %64 = vector.load %arg5[%c0_26, %c0_27, %c0_28] : memref<1x2x128xf32, #tpu.memory_space<vmem>>, vector<1x2x128xf32>
    %65 = vector.shape_cast %64 : vector<1x2x128xf32> to vector<2x128xf32>
    %66 = vector.shape_cast %63 : vector<2x128xf32> to vector<1x2x128xf32>
    tpu.vector_store %arg5[%c0_26, %c0_27, %c0_28], %66 {strides = array<i32>} : memref<1x2x128xf32, #tpu.memory_space<vmem>>, vector<1x2x128xf32>,
    return
  }
  func.func @transform_0(%arg0: i32) -> (i32, i32, i32) {
    %c0_i32 = arith.constant 0 : i32
    %c0_i32_0 = arith.constant 0 : i32
    %c0_i32_1 = arith.constant 0 : i32
    return %arg0, %c0_i32, %c0_i32_0 : i32, i32, i32
  }
  func.func @transform_1(%arg0: i32) -> (i32, i32, i32) {
    %c0_i32 = arith.constant 0 : i32
    %c0_i32_0 = arith.constant 0 : i32
    %c0_i32_1 = arith.constant 0 : i32
    return %arg0, %c0_i32, %c0_i32_0 : i32, i32, i32
  }
  func.func @transform_2(%arg0: i32) -> (i32, i32) {
    %c0_i32 = arith.constant 0 : i32
    %c0_i32_0 = arith.constant 0 : i32
    %c0_i32_1 = arith.constant 0 : i32
    return %c0_i32, %c0_i32_0 : i32, i32
  }
  func.func @transform_3(%arg0: i32) -> (i32, i32) {
    %c0_i32 = arith.constant 0 : i32
    %c0_i32_0 = arith.constant 0 : i32
    %c0_i32_1 = arith.constant 0 : i32
    return %c0_i32, %c0_i32_0 : i32, i32
  }
  func.func @transform_4(%arg0: i32) -> (i32, i32, i32) {
    %c0_i32 = arith.constant 0 : i32
    %c0_i32_0 = arith.constant 0 : i32
    %c0_i32_1 = arith.constant 0 : i32
    return %arg0, %c0_i32, %c0_i32_0 : i32, i32, i32
  }
}

</mosaic_0001>

<llo_original>
// kernel: reward_model_forward.1
$region0: #{reward_model_forward.1}
  #allocation0 [shape = 'u32[]', space=smem, size = 0x4, offset = 0x4, fixed_abs, tag = 'smem constant byte address 0x4 - core index']
  #allocation1 [shape = 'u32[72,128]{1,0:T(1,128)}', space=vmem, size = 0x9000, scoped, tag = 'internal scratch']
  %s0 = inlined_call_operand.vmem [shape: bf16[4,16,128], index: 0, kind: input, shape index: {}]
  %s1 = inlined_call_operand.vmem [shape: f32[4,1,16], index: 1, kind: input, shape index: {}]
  %s2 = inlined_call_operand.vmem [shape: bf16[128,640], index: 2, kind: input, shape index: {}]
  %s3 = inlined_call_operand.vmem [shape: f32[8,128], index: 3, kind: input, shape index: {}]
  %s4 = inlined_call_operand.vmem [shape: f32[2,2,128], index: 4, kind: output, shape index: {}]
  %s5 = sld [smem:[#allocation0]]
  $region49: #{reward_model_forward.1} parent=0
    _
  %s7 = ssub.s32 1, %s5
  %s8 = scalar_select 0, %s7, %s5
  loop: start=0, step=1, limit=4
  $region2: #{reward_model_forward.1} parent=0 // loop_pre_header
    _
  $region3: #{reward_model_forward.1} parent=0 // loop_header
    %s10 = sphi 0, %s14
    %p11 = scmp.ge.s32.totalorder %s10, 4
    %s20 = sphi 0, %s22
    %s23 = sphi 0, %s20
    %s24 = sphi 0, %s23
    %s40 = sphi 0, %s24
    %s46 = sphi 0, %s48
    %s49 = sphi 0, %s46
    %s50 = sphi 0, %s49
    %s66 = sphi 0, %s50
    %s70 = sphi 0, %s70
    %s72 = sphi 0, %s70
    %s73 = sphi 0, %s72
    %s87 = sphi 0, %s73
    %s91 = sphi 0, %s91
    %s93 = sphi 0, %s91
    %s94 = sphi 0, %s93
    %s108 = sphi 0, %s94
    %s114 = sphi 0, %s116
    %s117 = sphi 0, %s114
    %s118 = sphi 0, %s117
    %s134 = sphi 0, %s118
  $region4: #{reward_model_forward.1} parent=0 // loop_header_branch
    %13 = sbr.rel (%p11) target = $region8
  $region5: #{reward_model_forward.1} parent=0 // loop_body
    %s15 = ssub.s32 %s10, 1
    %s16 = ssub.s32 %s10, 2
    %s17 = sadd.s32 %s10, 1
    %s18 = ssub.s32 %s10, %s17
    %p19 = scmp.eq.s32.totalorder %s18, 0
    %s21 = sadd.s32 %s20, 1
    %s22 = scalar_select %p19, %s20, %s21
    %p25 = pneg %p19
    %p26 = scmp.eq.s32.totalorder %s10, 1
    %p27 = por %p25, %p26
    %p28 = scmp.ne.s32.totalorder %s20, %s23
    %p29 = scmp.eq.s32.totalorder %s10, 0
    %p30 = por %p28, %p29
    %p31 = scmp.ne.s32.totalorder %s20, %s23
    %p32 = scmp.eq.s32.totalorder %s15, 1
    %p33 = por %p31, %p32
    %p34 = scmp.ne.s32.totalorder %s23, %s24
    %p35 = scmp.eq.s32.totalorder %s15, 0
    %p36 = por %p34, %p35
    %p37 = scmp.ne.s32.totalorder %s23, %s24
    %p38 = scmp.eq.s32.totalorder %s16, 1
    %p39 = por %p37, %p38
    %p41 = scmp.ne.s32.totalorder %s24, %s40
    %p42 = scmp.eq.s32.totalorder %s16, 0
    %p43 = por %p41, %p42
    %s44 = ssub.s32 %s10, %s17
    %p45 = scmp.eq.s32.totalorder %s44, 0
    %s47 = sadd.s32 %s46, 1
    %s48 = scalar_select %p45, %s46, %s47
    %p51 = pneg %p45
    %p52 = scmp.eq.s32.totalorder %s10, 1
    %p53 = por %p51, %p52
    %p54 = scmp.ne.s32.totalorder %s46, %s49
    %p55 = scmp.eq.s32.totalorder %s10, 0
    %p56 = por %p54, %p55
    %p57 = scmp.ne.s32.totalorder %s46, %s49
    %p58 = scmp.eq.s32.totalorder %s15, 1
    %p59 = por %p57, %p58
    %p60 = scmp.ne.s32.totalorder %s49, %s50
    %p61 = scmp.eq.s32.totalorder %s15, 0
    %p62 = por %p60, %p61
    %p63 = scmp.ne.s32.totalorder %s49, %s50
    %p64 = scmp.eq.s32.totalorder %s16, 1
    %p65 = por %p63, %p64
    %p67 = scmp.ne.s32.totalorder %s50, %s66
    %p68 = scmp.eq.s32.totalorder %s16, 0
    %p69 = por %p67, %p68
    %s71 = sadd.s32 %s70, 1
    %p74 = scmp.eq.s32.totalorder %s10, 1
    %p75 = scmp.ne.s32.totalorder %s70, %s72
    %p76 = scmp.eq.s32.totalorder %s10, 0
    %p77 = por %p75, %p76
    %p78 = scmp.ne.s32.totalorder %s70, %s72
    %p79 = scmp.eq.s32.totalorder %s15, 1
    %p80 = por %p78, %p79
    %p81 = scmp.ne.s32.totalorder %s72, %s73
    %p82 = scmp.eq.s32.totalorder %s15, 0
    %p83 = por %p81, %p82
    %p84 = scmp.ne.s32.totalorder %s72, %s73
    %p85 = scmp.eq.s32.totalorder %s16, 1
    %p86 = por %p84, %p85
    %p88 = scmp.ne.s32.totalorder %s73, %s87
    %p89 = scmp.eq.s32.totalorder %s16, 0
    %p90 = por %p88, %p89
    %s92 = sadd.s32 %s91, 1
    %p95 = scmp.eq.s32.totalorder %s10, 1
    %p96 = scmp.ne.s32.totalorder %s91, %s93
    %p97 = scmp.eq.s32.totalorder %s10, 0
    %p98 = por %p96, %p97
    %p99 = scmp.ne.s32.totalorder %s91, %s93
    %p100 = scmp.eq.s32.totalorder %s15, 1
    %p101 = por %p99, %p100
    %p102 = scmp.ne.s32.totalorder %s93, %s94
    %p103 = scmp.eq.s32.totalorder %s15, 0
    %p104 = por %p102, %p103
    %p105 = scmp.ne.s32.totalorder %s93, %s94
    %p106 = scmp.eq.s32.totalorder %s16, 1
    %p107 = por %p105, %p106
    %p109 = scmp.ne.s32.totalorder %s94, %s108
    %p110 = scmp.eq.s32.totalorder %s16, 0
    %p111 = por %p109, %p110
    %s112 = ssub.s32 %s10, %s17
    %p113 = scmp.eq.s32.totalorder %s112, 0
    %s115 = sadd.s32 %s114, 1
    %s116 = scalar_select %p113, %s114, %s115
    %p119 = pneg %p113
    %p120 = scmp.eq.s32.totalorder %s10, 1
    %p121 = por %p119, %p120
    %p122 = scmp.ne.s32.totalorder %s114, %s117
    %p123 = scmp.eq.s32.totalorder %s10, 0
    %p124 = por %p122, %p123
    %p125 = scmp.ne.s32.totalorder %s114, %s117
    %p126 = scmp.eq.s32.totalorder %s15, 1
    %p127 = por %p125, %p126
    %p128 = scmp.ne.s32.totalorder %s117, %s118
    %p129 = scmp.eq.s32.totalorder %s15, 0
    %p130 = por %p128, %p129
    %p131 = scmp.ne.s32.totalorder %s117, %s118
    %p132 = scmp.eq.s32.totalorder %s16, 1
    %p133 = por %p131, %p132
    %p135 = scmp.ne.s32.totalorder %s118, %s134
    %p136 = scmp.eq.s32.totalorder %s16, 0
    %p137 = por %p135, %p136
    %p138 = scmp.le.s32.totalorder 1, %s10
    %p139 = scmp.lt.s32.totalorder %s10, 3
    %p140 = pnand %p138, %p139
    %p141 = pneg %p140
    // Predicated region
    $region9: #{reward_model_forward.1} parent=5 // pred_check
      _
    $region10: #{reward_model_forward.1} parent=5 // pred_check_branch
      %143 = sbr.rel (%p140) target = $region12
    $region11: #{reward_model_forward.1} parent=5 // pred_region
      %s144 = ssub.s32 %s10, 1
      // Predicated region
      $region13: #{reward_model_forward.1} parent=11 // pred_check
        %p145 = pneg %p83
      $region14: #{reward_model_forward.1} parent=11 // pred_check_branch
        %147 = sbr.rel (%p145) target = $region16
      $region15: #{reward_model_forward.1} parent=11 // pred_region
        _
      $region16: #{reward_model_forward.1} parent=11 // pred_fallthru
        _
      // Predicated region
      $region17: #{reward_model_forward.1} parent=11 // pred_check
        %p148 = pneg %p104
      $region18: #{reward_model_forward.1} parent=11 // pred_check_branch
        %150 = sbr.rel (%p148) target = $region20
      $region19: #{reward_model_forward.1} parent=11 // pred_region
        _
      $region20: #{reward_model_forward.1} parent=11 // pred_fallthru
        _
    $region12: #{reward_model_forward.1} parent=5 // pred_fallthru
      _
    %p151 = scmp.lt.s32.totalorder %s10, 2
    // Predicated region
    $region21: #{reward_model_forward.1} parent=5 // pred_check
      %p152 = pneg %p151
    $region22: #{reward_model_forward.1} parent=5 // pred_check_branch
      %154 = sbr.rel (%p152) target = $region24
    $region23: #{reward_model_forward.1} parent=5 // pred_region
      // Predicated region
      $region25: #{reward_model_forward.1} parent=23 // pred_check
        %p155 = pneg %p30
      $region26: #{reward_model_forward.1} parent=23 // pred_check_branch
        %157 = sbr.rel (%p155) target = $region28
      $region27: #{reward_model_forward.1} parent=23 // pred_region
        %s158 = smul.u32 2, %s10
        %p159 = scmp.lt.s32.totalorder %s158, 3
        %s160 = scalar_select %p159, %s158, 3
        %s161 = smul.addr %s160, 2
        %s162 = smul.addr %s161, 4
        %s163 = scalar_lea.vmem %s0, %s162
        %s164 = smul.u32 2, %s10
      $region28: #{reward_model_forward.1} parent=23 // pred_fallthru
        _
      // Predicated region
      $region29: #{reward_model_forward.1} parent=23 // pred_check
        %p165 = pneg %p56
      $region30: #{reward_model_forward.1} parent=23 // pred_check_branch
        %167 = sbr.rel (%p165) target = $region32
      $region31: #{reward_model_forward.1} parent=23 // pred_region
        %s168 = smul.u32 2, %s10
        %p169 = scmp.lt.s32.totalorder %s168, 3
        %s170 = scalar_select %p169, %s168, 3
        %s171 = scalar_lea.vmem %s1, %s170
        %s172 = smul.u32 2, %s10
      $region32: #{reward_model_forward.1} parent=23 // pred_fallthru
        _
    $region24: #{reward_model_forward.1} parent=5 // pred_fallthru
      _
    %p173 = scmp.le.s32.totalorder 1, %s10
    %p174 = scmp.lt.s32.totalorder %s10, 3
    %p175 = pnand %p173, %p174
    %p176 = pneg %p175
    // Predicated region
    $region33: #{reward_model_forward.1} parent=5 // pred_check
      _
    $region34: #{reward_model_forward.1} parent=5 // pred_check_branch
      %178 = sbr.rel (%p175) target = $region36
    $region35: #{reward_model_forward.1} parent=5 // pred_region
      %s179 = ssub.s32 %s10, 1
      %s180 = smul.u32 2, %s15
      %p181 = scmp.lt.s32.totalorder %s180, 3
      %s182 = scalar_select %p181, %s180, 3
      %s183 = smul.addr %s182, 2
      %s184 = smul.addr %s183, 4
      %s185 = scalar_lea.vmem %s0, %s184
      %p186 = pneg %p36
      %p187 = pneg %p33
      %s188 = smul.u32 2, %s15
      %p189 = scmp.lt.s32.totalorder %s188, 3
      %s190 = scalar_select %p189, %s188, 3
      %s191 = scalar_lea.vmem %s1, %s190
      %p192 = pneg %p62
      %p193 = pneg %p59
      %p194 = pneg %p83
      %p195 = pneg %p80
      %p196 = pneg %p104
      %p197 = pneg %p101
      %p198 = pneg %p130
      %p199 = pneg %p127
      %p200 = scmp.lt.s32.totalorder %s15, 1
      %s201 = scalar_select %p200, %s15, 1
      %s202 = smul.addr %s201, 2
      %s203 = scalar_lea.vmem %s4, %s202
      %s204 = smul.u32 2, %s15
      %p205 = scmp.lt.s32.totalorder %s204, 3
      %s206 = scalar_select %p205, %s204, 3
      %s207 = smul.addr %s206, 2
      %s208 = smul.addr %s207, 4
      %s209 = scalar_lea.vmem %s0, %s208
      %s210 = smul.u32 2, %s15
      %s211 = smul.u32 2, %s15
      %p212 = scmp.lt.s32.totalorder %s211, 3
      %s213 = scalar_select %p212, %s211, 3
      %s214 = scalar_lea.vmem %s1, %s213
      %s215 = smul.u32 2, %s15
      %p216 = scmp.lt.s32.totalorder %s15, 1
      %s217 = scalar_select %p216, %s15, 1
      %s218 = smul.addr %s217, 2
      %s219 = scalar_lea.vmem %s4, %s218
      %v221 = vld [vmem:[%s2] sm:$0xff]
      %v222 = vld [vmem:[%s2 + $0x14] sm:$0xff]
      %v223 = vld [vmem:[%s2 + $0x28] sm:$0xff]
      %v224 = vld [vmem:[%s2 + $0x3c] sm:$0xff]
      %v225 = vld [vmem:[%s2 + $0x50] sm:$0xff]
      %v226 = vld [vmem:[%s2 + $0x64] sm:$0xff]
      %v227 = vld [vmem:[%s2 + $0x78] sm:$0xff]
      %v228 = vld [vmem:[%s2 + $0x8c] sm:$0xff]
      %v229 = vld [vmem:[%s2 + $0xa0] sm:$0xff]
      %v230 = vld [vmem:[%s2 + $0xb4] sm:$0xff]
      %v231 = vld [vmem:[%s2 + $0xc8] sm:$0xff]
      %v232 = vld [vmem:[%s2 + $0xdc] sm:$0xff]
      %v233 = vld [vmem:[%s2 + $0xf0] sm:$0xff]
      %v234 = vld [vmem:[%s2 + $0x104] sm:$0xff]
      %v235 = vld [vmem:[%s2 + $0x118] sm:$0xff]
      %v236 = vld [vmem:[%s2 + $0x12c] sm:$0xff]
      %v237 = vld [vmem:[%s2 + $0x8] sm:$0xf]
      %v238 = vld [vmem:[%s2 + $0x1c] sm:$0xf]
      %v239 = vld [vmem:[%s2 + $0x30] sm:$0xf]
      %v240 = vld [vmem:[%s2 + $0x44] sm:$0xf]
      %v241 = vld [vmem:[%s2 + $0x58] sm:$0xf]
      %v242 = vld [vmem:[%s2 + $0x6c] sm:$0xf]
      %v243 = vld [vmem:[%s2 + $0x80] sm:$0xf]
      %v244 = vld [vmem:[%s2 + $0x94] sm:$0xf]
      %v245 = vld [vmem:[%s2 + $0xa8] sm:$0xf]
      %v246 = vld [vmem:[%s2 + $0xbc] sm:$0xf]
      %v247 = vld [vmem:[%s2 + $0xd0] sm:$0xf]
      %v248 = vld [vmem:[%s2 + $0xe4] sm:$0xf]
      %v249 = vld [vmem:[%s2 + $0xf8] sm:$0xf]
      %v250 = vld [vmem:[%s2 + $0x10c] sm:$0xf]
      %v251 = vld [vmem:[%s2 + $0x120] sm:$0xf]
      %v252 = vld [vmem:[%s2 + $0x134] sm:$0xf]
      %v253 = vld [vmem:[%s2 + $0xc] sm:$0xf]
      %v254 = vld [vmem:[%s2 + $0x20] sm:$0xf]
      %v255 = vld [vmem:[%s2 + $0x34] sm:$0xf]
      %v256 = vld [vmem:[%s2 + $0x48] sm:$0xf]
      %v257 = vld [vmem:[%s2 + $0x5c] sm:$0xf]
      %v258 = vld [vmem:[%s2 + $0x70] sm:$0xf]
      %v259 = vld [vmem:[%s2 + $0x84] sm:$0xf]
      %v260 = vld [vmem:[%s2 + $0x98] sm:$0xf]
      %v261 = vld [vmem:[%s2 + $0xac] sm:$0xf]
      %v262 = vld [vmem:[%s2 + $0xc0] sm:$0xf]
      %v263 = vld [vmem:[%s2 + $0xd4] sm:$0xf]
      %v264 = vld [vmem:[%s2 + $0xe8] sm:$0xf]
      %v265 = vld [vmem:[%s2 + $0xfc] sm:$0xf]
      %v266 = vld [vmem:[%s2 + $0x110] sm:$0xf]
      %v267 = vld [vmem:[%s2 + $0x124] sm:$0xf]
      %v268 = vld [vmem:[%s2 + $0x138] sm:$0xf]
      %v269 = vld [vmem:[%s2 + $0x10] sm:$0xf]
      %v270 = vld [vmem:[%s2 + $0x24] sm:$0xf]
      %v271 = vld [vmem:[%s2 + $0x38] sm:$0xf]
      %v272 = vld [vmem:[%s2 + $0x4c] sm:$0xf]
      %v273 = vld [vmem:[%s2 + $0x60] sm:$0xf]
      %v274 = vld [vmem:[%s2 + $0x74] sm:$0xf]
      %v275 = vld [vmem:[%s2 + $0x88] sm:$0xf]
      %v276 = vld [vmem:[%s2 + $0x9c] sm:$0xf]
      %v277 = vld [vmem:[%s2 + $0xb0] sm:$0xf]
      %v278 = vld [vmem:[%s2 + $0xc4] sm:$0xf]
      %v279 = vld [vmem:[%s2 + $0xd8] sm:$0xf]
      %v280 = vld [vmem:[%s2 + $0xec] sm:$0xf]
      %v281 = vld [vmem:[%s2 + $0x100] sm:$0xf]
      %v282 = vld [vmem:[%s2 + $0x114] sm:$0xf]
      %v283 = vld [vmem:[%s2 + $0x128] sm:$0xf]
      %v284 = vld [vmem:[%s2 + $0x13c] sm:$0xf]
      %v285 = vld [vmem:[%s209] sm:$0xf]
      %v286 = vld [vmem:[%s209 + $0x4] sm:$0xf]
      %v287 = vld [vmem:[%s209 + $0x8] sm:$0xf]
      %v288 = vld [vmem:[%s209 + $0xc] sm:$0xf]
      %v289 = vld [vmem:[%s214] sm:$0x1]
      %v290 = vld [vmem:[%s214 + $0x1] sm:$0x1]
      %v295 = vunpack.c.l.b16 %v285
      %v296 = vunpack.c.l.b16 %v286
      %v297 = vunpack.c.l.b16 %v287
      %v298 = vunpack.c.l.b16 %v288
      %v299 = vpack.c.b16 %v296, %v295
      %v300 = vpack.c.b16 %v298, %v297
      %v319 = vunpack.c.l.b16 %v221
      %v320 = vunpack.c.h.b16 %v221
      %v321 = vunpack.c.l.b16 %v222
      %v322 = vunpack.c.h.b16 %v222
      %v323 = vunpack.c.l.b16 %v223
      %v324 = vunpack.c.h.b16 %v223
      %v325 = vunpack.c.l.b16 %v224
      %v326 = vunpack.c.h.b16 %v224
      %v327 = vunpack.c.l.b16 %v225
      %v328 = vunpack.c.h.b16 %v225
      %v329 = vunpack.c.l.b16 %v226
      %v330 = vunpack.c.h.b16 %v226
      %v331 = vunpack.c.l.b16 %v227
      %v332 = vunpack.c.h.b16 %v227
      %v333 = vunpack.c.l.b16 %v228
      %v334 = vunpack.c.h.b16 %v228
      %v335 = vunpack.c.l.b16 %v229
      %v336 = vunpack.c.h.b16 %v229
      %v337 = vunpack.c.l.b16 %v230
      %v338 = vunpack.c.h.b16 %v230
      %v339 = vunpack.c.l.b16 %v231
      %v340 = vunpack.c.h.b16 %v231
      %v341 = vunpack.c.l.b16 %v232
      %v342 = vunpack.c.h.b16 %v232
      %v343 = vunpack.c.l.b16 %v233
      %v344 = vunpack.c.h.b16 %v233
      %v345 = vunpack.c.l.b16 %v234
      %v346 = vunpack.c.h.b16 %v234
      %v347 = vunpack.c.l.b16 %v235
      %v348 = vunpack.c.h.b16 %v235
      %v349 = vunpack.c.l.b16 %v236
      %v350 = vunpack.c.h.b16 %v236
      %v351 = vpack.c.b16 %v321, %v319
      %v352 = vpack.c.b16 %v322, %v320
      %v353 = vpack.c.b16 %v325, %v323
      %v354 = vpack.c.b16 %v326, %v324
      %v355 = vpack.c.b16 %v329, %v327
      %v356 = vpack.c.b16 %v330, %v328
      %v357 = vpack.c.b16 %v333, %v331
      %v358 = vpack.c.b16 %v334, %v332
      %v359 = vpack.c.b16 %v337, %v335
      %v360 = vpack.c.b16 %v338, %v336
      %v361 = vpack.c.b16 %v341, %v339
      %v362 = vpack.c.b16 %v342, %v340
      %v363 = vpack.c.b16 %v345, %v343
      %v364 = vpack.c.b16 %v346, %v344
      %v365 = vpack.c.b16 %v349, %v347
      %v366 = vpack.c.b16 %v350, %v348
      %383 = vmatpush.bf16.msra.mxu0 %v365
      %384 = vmatpush.bf16.msra.mxu0 %v363
      %385 = vmatpush.bf16.msra.mxu0 %v361
      %386 = vmatpush.bf16.msra.mxu0 %v359
      %387 = vmatpush.bf16.msra.mxu0 %v357
      %388 = vmatpush.bf16.msra.mxu0 %v355
      %389 = vmatpush.bf16.msra.mxu0 %v353
      %390 = vmatpush.bf16.msra.mxu0 %v351
      %391 = vmatmul.bf16.gmra.mxu0 %v299
      %v392 = vpop.f32.mrf.mxu0
      %v393 = vadd.f32 0.0, %v392
      %v394 = vpop.f32.mrf.mxu0
      %v395 = vadd.f32 0.0, %v394
      %396 = vmatmul.bf16.gmra.mxu0 %v300
      %v397 = vpop.f32.mrf.mxu0
      %v398 = vadd.f32 0.0, %v397
      %v399 = vpop.f32.mrf.mxu0
      %v400 = vadd.f32 0.0, %v399
      %401 = vdwg.mxu0
      %402 = vmatpush.bf16.msra.mxu0 %v366
      %403 = vmatpush.bf16.msra.mxu0 %v364
      %404 = vmatpush.bf16.msra.mxu0 %v362
      %405 = vmatpush.bf16.msra.mxu0 %v360
      %406 = vmatpush.bf16.msra.mxu0 %v358
      %407 = vmatpush.bf16.msra.mxu0 %v356
      %408 = vmatpush.bf16.msra.mxu0 %v354
      %409 = vmatpush.bf16.msra.mxu0 %v352
      %410 = vmatmul.bf16.gmra.mxu0 %v299
      %v411 = vpop.f32.mrf.mxu0
      %v412 = vadd.f32 0.0, %v411
      %v413 = vpop.f32.mrf.mxu0
      %v414 = vadd.f32 0.0, %v413
      %415 = vmatmul.bf16.gmra.mxu0 %v300
      %v416 = vpop.f32.mrf.mxu0
      %v417 = vadd.f32 0.0, %v416
      %v418 = vpop.f32.mrf.mxu0
      %v419 = vadd.f32 0.0, %v418
      %420 = vdwg.mxu0
      %v421 = vpack.c.bf16 %v393, %v393
      %v422 = vpack.c.bf16 %v395, %v395
      %v423 = vpack.c.bf16 %v398, %v398
      %v424 = vpack.c.bf16 %v400, %v400
      %v425 = vpack.c.bf16 %v412, %v412
      %v426 = vpack.c.bf16 %v414, %v414
      %v427 = vpack.c.bf16 %v417, %v417
      %v428 = vpack.c.bf16 %v419, %v419
      %v429 = vpack.c.b16 %v296, %v296
      %v430 = vpack.c.b16 %v298, %v298
      %v431 = vunpack.c.l.b16 %v429
      %v432 = vunpack.c.l.b16 %v430
      %v433 = vrot.slane %v431, 7
      %v434 = vrot.slane %v432, 6
      %vm435 = vcmask 1041409
      %v436 = vsel %vm435, %v434, %v433
      %v437 = vpack.c.b16 %v436, %v436
      %v455 = vunpack.c.l.b16 %v237
      %v456 = vunpack.c.l.b16 %v238
      %v457 = vunpack.c.l.b16 %v239
      %v458 = vunpack.c.l.b16 %v240
      %v459 = vunpack.c.l.b16 %v241
      %v460 = vunpack.c.l.b16 %v242
      %v461 = vunpack.c.l.b16 %v243
      %v462 = vunpack.c.l.b16 %v244
      %v463 = vunpack.c.l.b16 %v245
      %v464 = vunpack.c.l.b16 %v246
      %v465 = vunpack.c.l.b16 %v247
      %v466 = vunpack.c.l.b16 %v248
      %v467 = vunpack.c.l.b16 %v249
      %v468 = vunpack.c.l.b16 %v250
      %v469 = vunpack.c.l.b16 %v251
      %v470 = vunpack.c.l.b16 %v252
      %v471 = vpack.c.b16 %v456, %v455
      %v472 = vpack.c.b16 %v458, %v457
      %v473 = vpack.c.b16 %v460, %v459
      %v474 = vpack.c.b16 %v462, %v461
      %v475 = vpack.c.b16 %v464, %v463
      %v476 = vpack.c.b16 %v466, %v465
      %v477 = vpack.c.b16 %v468, %v467
      %v478 = vpack.c.b16 %v470, %v469
      %487 = vmatpush.bf16.msra.mxu0 %v478
      %488 = vmatpush.bf16.msra.mxu0 %v477
      %489 = vmatpush.bf16.msra.mxu0 %v476
      %490 = vmatpush.bf16.msra.mxu0 %v475
      %491 = vmatpush.bf16.msra.mxu0 %v474
      %492 = vmatpush.bf16.msra.mxu0 %v473
      %493 = vmatpush.bf16.msra.mxu0 %v472
      %494 = vmatpush.bf16.msra.mxu0 %v471
      %495 = vmatmul.bf16.gmra.mxu0 %v437
      %v496 = vpop.f32.mrf.mxu0
      %v497 = vadd.f32 0.0, %v496
      %v498 = vpop.f32.mrf.mxu0
      %499 = vdwg.mxu0
      %v500 = vpack.c.bf16 %v497, %v497
      %v502 = vrot.slane %v500, 3
      %vm503 = vcmask 1040384
      %v506 = vsel %vm503, %v500, %v502
      %v508 = vunpack.i.l.s16 %v506
      %v509 = vunpack.i.h.s16 %v506
      %v510 = vpack.i.b16 %v508, %v508
      %v511 = vperm.slane %v510, 0
      %v515 = vunpack.c.l.b16 %v421
      %v516 = vunpack.c.l.b16 %v422
      %v517 = vpack.c.b16 %v516, %v515
      %519 = vmatpush.bf16.xpose.msra.mxu0 0
      %520 = vmatpush.bf16.xpose.msra.mxu0 0
      %521 = vmatpush.bf16.xpose.msra.mxu0 0
      %522 = vmatpush.bf16.xpose.msra.mxu0 0
      %523 = vmatpush.bf16.xpose.msra.mxu0 0
      %524 = vmatpush.bf16.xpose.msra.mxu0 0
      %525 = vmatpush.bf16.xpose.msra.mxu0 0
      %526 = vmatpush.bf16.xpose.msra.mxu0 %v517
      %527 = vmatmul.bf16.gmra.mxu0 %v511
      %v528 = vpop.f32.mrf.mxu0
      %v529 = vadd.f32 0.0, %v528
      %v530 = vpop.f32.mrf.mxu0
      %531 = vdwg.mxu0
      %v532 = vpack.i.b16 %v509, %v509
      %v533 = vperm.slane %v532, 0
      %v537 = vunpack.c.l.b16 %v423
      %v538 = vunpack.c.l.b16 %v424
      %v539 = vpack.c.b16 %v538, %v537
      %541 = vmatpush.bf16.xpose.msra.mxu0 0
      %542 = vmatpush.bf16.xpose.msra.mxu0 0
      %543 = vmatpush.bf16.xpose.msra.mxu0 0
      %544 = vmatpush.bf16.xpose.msra.mxu0 0
      %545 = vmatpush.bf16.xpose.msra.mxu0 0
      %546 = vmatpush.bf16.xpose.msra.mxu0 0
      %547 = vmatpush.bf16.xpose.msra.mxu0 0
      %548 = vmatpush.bf16.xpose.msra.mxu0 %v539
      %549 = vmatmul.bf16.gmra.mxu0 %v533
      %v550 = vpop.f32.mrf.mxu0
      %v551 = vadd.f32 0.0, %v550
      %v552 = vpop.f32.mrf.mxu0
      %553 = vdwg.mxu0
      %v554 = vmul.f32 %v529, 0.17677669
      %v555 = vmul.f32 %v551, 0.17677669
      %v556 = vsub.f32 %v289, 1.0
      %v557 = vsub.f32 %v290, 1.0
      %v558 = vmul.f32 %v556, 1e+30
      %v559 = vmul.f32 %v557, 1e+30
      %v560 = vadd.f32 %v554, %v558
      %v561 = vadd.f32 %v555, %v559
      %vm562 = vcmask 122880
      %v563 = vsel %vm562, %v560, -inf
      %564 = vmax.xlane.f32.xlu0 %v563
      %v565 = vpop.xlane.xlu0 %564
      %v566 = vsel %vm562, %v561, -inf
      %567 = vmax.xlane.f32.xlu0 %v566
      %v568 = vpop.xlane.xlu0 %567
      %v569 = vsub.f32 %v560, %v565
      %v570 = vsub.f32 %v561, %v568
      %v571 = vmul.f32 %v569, 1.442695
      %v572 = vpow.pop %v571
      %v573 = vmul.f32 %v570, 1.442695
      %v574 = vpow.pop %v573
      %v575 = vsel %vm562, %v572, 0.0
      %576 = vadd.xlane.f32.xlu0 %v575
      %v577 = vpop.xlane.xlu0 %576
      %v578 = vsel %vm562, %v574, 0.0
      %579 = vadd.xlane.f32.xlu0 %v578
      %v580 = vpop.xlane.xlu0 %579
      %v581 = vrcp.pop %v577
      %v582 = vrcp.pop %v580
      %v583 = vmul.f32 %v572, %v581
      %v584 = vmul.f32 %v574, %v582
      %v585 = vpack.c.bf16 %v583, %v583
      %v586 = vpack.c.bf16 %v584, %v584
      %v589 = vunpack.c.l.b16 %v425
      %v590 = vunpack.c.l.b16 %v426
      %v591 = vpack.c.b16 %v590, %v589
      %vm593 = vcmask 130048
      %v595 = vsel %vm593, %v585, 0
      %597 = vmatpush.bf16.msra.mxu0 0
      %598 = vmatpush.bf16.msra.mxu0 0
      %599 = vmatpush.bf16.msra.mxu0 0
      %600 = vmatpush.bf16.msra.mxu0 0
      %601 = vmatpush.bf16.msra.mxu0 0
      %602 = vmatpush.bf16.msra.mxu0 0
      %603 = vmatpush.bf16.msra.mxu0 0
      %604 = vmatpush.bf16.msra.mxu0 %v591
      %605 = vmatmul.bf16.gmra.mxu0 %v595
      %v606 = vpop.f32.mrf.mxu0
      %v607 = vadd.f32 0.0, %v606
      %v608 = vpop.f32.mrf.mxu0
      %609 = vdwg.mxu0
      %v612 = vunpack.c.l.b16 %v427
      %v613 = vunpack.c.l.b16 %v428
      %v614 = vpack.c.b16 %v613, %v612
      %v617 = vsel %vm593, %v586, 0
      %619 = vmatpush.bf16.msra.mxu0 0
      %620 = vmatpush.bf16.msra.mxu0 0
      %621 = vmatpush.bf16.msra.mxu0 0
      %622 = vmatpush.bf16.msra.mxu0 0
      %623 = vmatpush.bf16.msra.mxu0 0
      %624 = vmatpush.bf16.msra.mxu0 0
      %625 = vmatpush.bf16.msra.mxu0 0
      %626 = vmatpush.bf16.msra.mxu0 %v614
      %627 = vmatmul.bf16.gmra.mxu0 %v617
      %v628 = vpop.f32.mrf.mxu0
      %v629 = vadd.f32 0.0, %v628
      %v630 = vpop.f32.mrf.mxu0
      %631 = vdwg.mxu0
      %v632 = vpack.c.bf16 %v607, %v607
      %v633 = vpack.c.bf16 %v629, %v629
      %v634 = vunpack.c.l.bf16 %v286
      %v635 = vunpack.c.l.bf16 %v288
      %v638 = vunpack.c.l.b16 %v632
      %v639 = vunpack.c.l.b16 %v633
      %v640 = vrot.slane %v639, 7
      %v641 = vsel %vm435, %v640, %v638
      %v642 = vpack.c.b16 %v641, %v641
      %v660 = vunpack.c.l.b16 %v253
      %v661 = vunpack.c.l.b16 %v254
      %v662 = vunpack.c.l.b16 %v255
      %v663 = vunpack.c.l.b16 %v256
      %v664 = vunpack.c.l.b16 %v257
      %v665 = vunpack.c.l.b16 %v258
      %v666 = vunpack.c.l.b16 %v259
      %v667 = vunpack.c.l.b16 %v260
      %v668 = vunpack.c.l.b16 %v261
      %v669 = vunpack.c.l.b16 %v262
      %v670 = vunpack.c.l.b16 %v263
      %v671 = vunpack.c.l.b16 %v264
      %v672 = vunpack.c.l.b16 %v265
      %v673 = vunpack.c.l.b16 %v266
      %v674 = vunpack.c.l.b16 %v267
      %v675 = vunpack.c.l.b16 %v268
      %v676 = vpack.c.b16 %v661, %v660
      %v677 = vpack.c.b16 %v663, %v662
      %v678 = vpack.c.b16 %v665, %v664
      %v679 = vpack.c.b16 %v667, %v666
      %v680 = vpack.c.b16 %v669, %v668
      %v681 = vpack.c.b16 %v671, %v670
      %v682 = vpack.c.b16 %v673, %v672
      %v683 = vpack.c.b16 %v675, %v674
      %v694 = vrot.slane %v634, 7
      %v695 = vrot.slane %v635, 6
      %v696 = vsel %vm435, %v695, %v694
      %698 = vmatpush.bf16.msra.mxu0 %v683
      %699 = vmatpush.bf16.msra.mxu0 %v682
      %700 = vmatpush.bf16.msra.mxu0 %v681
      %701 = vmatpush.bf16.msra.mxu0 %v680
      %702 = vmatpush.bf16.msra.mxu0 %v679
      %703 = vmatpush.bf16.msra.mxu0 %v678
      %704 = vmatpush.bf16.msra.mxu0 %v677
      %705 = vmatpush.bf16.msra.mxu0 %v676
      %706 = vmatmul.bf16.gmra.mxu0 %v642
      %v707 = vpop.f32.mrf.mxu0
      %v708 = vadd.f32 %v696, %v707
      %v709 = vpop.f32.mrf.mxu0
      %710 = vdwg.mxu0
      %v711 = vld [vmem:[%s3] sm:$0x1]
      %v712 = vld [vmem:[%s3 + $0x1] sm:$0x1]
      %v713 = vld [vmem:[%s3 + $0x2] sm:$0x1]
      %v714 = vpack.c.bf16 %v708, %v708
      %v715 = vperm.slane %v711, 0
      %v732 = vunpack.c.l.b16 %v269
      %v733 = vunpack.c.l.b16 %v270
      %v734 = vunpack.c.l.b16 %v271
      %v735 = vunpack.c.l.b16 %v272
      %v736 = vunpack.c.l.b16 %v273
      %v737 = vunpack.c.l.b16 %v274
      %v738 = vunpack.c.l.b16 %v275
      %v739 = vunpack.c.l.b16 %v276
      %v740 = vunpack.c.l.b16 %v277
      %v741 = vunpack.c.l.b16 %v278
      %v742 = vunpack.c.l.b16 %v279
      %v743 = vunpack.c.l.b16 %v280
      %v744 = vunpack.c.l.b16 %v281
      %v745 = vunpack.c.l.b16 %v282
      %v746 = vunpack.c.l.b16 %v283
      %v747 = vunpack.c.l.b16 %v284
      %v748 = vpack.c.b16 %v733, %v732
      %v749 = vpack.c.b16 %v735, %v734
      %v750 = vpack.c.b16 %v737, %v736
      %v751 = vpack.c.b16 %v739, %v738
      %v752 = vpack.c.b16 %v741, %v740
      %v753 = vpack.c.b16 %v743, %v742
      %v754 = vpack.c.b16 %v745, %v744
      %v755 = vpack.c.b16 %v747, %v746
      %764 = vmatpush.bf16.msra.mxu0 %v755
      %765 = vmatpush.bf16.msra.mxu0 %v754
      %766 = vmatpush.bf16.msra.mxu0 %v753
      %767 = vmatpush.bf16.msra.mxu0 %v752
      %768 = vmatpush.bf16.msra.mxu0 %v751
      %769 = vmatpush.bf16.msra.mxu0 %v750
      %770 = vmatpush.bf16.msra.mxu0 %v749
      %771 = vmatpush.bf16.msra.mxu0 %v748
      %772 = vmatmul.bf16.gmra.mxu0 %v714
      %v773 = vpop.f32.mrf.mxu0
      %v774 = vadd.f32 %v715, %v773
      %v775 = vpop.f32.mrf.mxu0
      %776 = vdwg.mxu0
      %v777 = vxor.u32 %v774, 2147483648
      %v778 = vmul.f32 %v777, 1.442695
      %v779 = vpow.pop %v778
      %v780 = vadd.f32 %v779, 1.0
      %v781 = vrcp.pop %v780
      %v782 = vmul.f32 %v780, %v781
      %v783 = vsub.f32 1.0, %v782
      %v784 = vmul.f32 %v781, %v783
      %v785 = vadd.f32 %v781, %v784
      %vm786 = vweird.f32 %v780
      %vm787 = vweird.f32 %v781
      %vm788 = vmor %vm786, %vm787
      %v789 = vsel %vm788, %v781, %v785
      %v790 = vand.u32 2147483647, %v780
      %vm791 = vcmp.eq.f32.partialorder %v790, 8.507059e+37
      %v792 = vand.u32 %v780, 2147483648
      %v793 = vor.u32 1.1754944e-38, %v792
      %v794 = vsel %vm791, %v793, %v789
      %v795 = vmul.f32 1.0, %v794
      %v796 = vmul.f32 %v774, %v795
      %v797 = vperm.slane %v712, 0
      %v798 = vmul.f32 %v796, %v797
      %vm799 = vcmask 1041408
      %v800 = vsel %vm799, %v798, 0.0
      %801 = vadd.xlane.f32.xlu0 %v800
      %v802 = vpop.xlane.xlu0 %801
      %v803 = vperm.slane %v713, 0
      %v804 = vadd.f32 %v802, %v803
      %806 = vset.pattern.permute.xlu0 0
      %807 = vperm.xlu0 %806, %v804
      %v808 = vpop.permute.xlu0 %807
      %810 = vst [vmem:[%s219] sm:$0x3] %v808
      %p811 = scmp.lt.s32.totalorder %s15, 1
      %s812 = scalar_select %p811, %s15, 1
      %s813 = smul.addr %s812, 2
      %s814 = scalar_lea.vmem %s4, %s813
      // Predicated region
      $region37: #{reward_model_forward.1} parent=35 // pred_check
        %p815 = pneg %p127
      $region38: #{reward_model_forward.1} parent=35 // pred_check_branch
        %817 = sbr.rel (%p815) target = $region40
      $region39: #{reward_model_forward.1} parent=35 // pred_region
        _
      $region40: #{reward_model_forward.1} parent=35 // pred_fallthru
        _
    $region36: #{reward_model_forward.1} parent=5 // pred_fallthru
      _
    %p818 = scmp.le.s32.totalorder 2, %s10
    // Predicated region
    $region41: #{reward_model_forward.1} parent=5 // pred_check
      %p819 = pneg %p818
    $region42: #{reward_model_forward.1} parent=5 // pred_check_branch
      %821 = sbr.rel (%p819) target = $region44
    $region43: #{reward_model_forward.1} parent=5 // pred_region
      %s822 = ssub.s32 %s10, 2
      // Predicated region
      $region45: #{reward_model_forward.1} parent=43 // pred_check
        %p823 = pneg %p133
      $region46: #{reward_model_forward.1} parent=43 // pred_check_branch
        %825 = sbr.rel (%p823) target = $region48
      $region47: #{reward_model_forward.1} parent=43 // pred_region
        %p826 = scmp.lt.s32.totalorder %s16, 1
        %s827 = scalar_select %p826, %s16, 1
        %s828 = smul.addr %s827, 2
        %s829 = scalar_lea.vmem %s4, %s828
      $region48: #{reward_model_forward.1} parent=43 // pred_fallthru
        _
    $region44: #{reward_model_forward.1} parent=5 // pred_fallthru
      _
  $region6: #{reward_model_forward.1} parent=0 // loop_footer
    %s14 = sadd.s32 1, %s10
  $region7: #{reward_model_forward.1} parent=0 // loop_footer_branch
    %9 = sbr.rel target = $region3
  $region8: #{reward_model_forward.1} parent=0 // loop_exit
    _

</llo_original>
